<compile_context>
chip_gen: v5e
topology: v5e:2x2
jax: 0.10.0
libtpu: 0.0.40
codegen_flags: <defaults>
</compile_context>

<pallas_src>
import jax
import jax.numpy as jnp
from jax import lax
from jax.experimental import pallas as pl
from jax.experimental.pallas import tpu as pltpu


def _cdiv(a: int, b: int) -> int:
    return (a + b - 1) // b


def _round_up(x: int, m: int) -> int:
    return _cdiv(x, m) * m


def _choose_tile(dim: int, granule: int, max_tile: int) -> int:
    """Balanced tile split: full dim when it fits, else equal-ish granule-aligned tiles."""
    if dim <= max_tile:
        return dim  # single tile == full array dim -> no alignment / padding needed
    ntiles = _cdiv(dim, max_tile)
    return _round_up(_cdiv(dim, ntiles), granule)


def _matmul_kernel_acc(x_ref, w_ref, o_ref, acc_ref):
    """One (tm, tn) output block; K is the trailing grid axis (f32 accumulator)."""
    k = pl.program_id(2)

    @pl.when(k == 0)
    def _init():
        acc_ref[...] = jnp.zeros_like(acc_ref)

    # x: (tm, tk), W: (tn, tk) -> contract last dims (x @ W.T) on the MXU.
    acc_ref[...] += lax.dot_general(
        x_ref[...], w_ref[...],
        dimension_numbers=(((1,), (1,)), ((), ())),
        preferred_element_type=jnp.float32)

    @pl.when(k == pl.num_programs(2) - 1)
    def _finalize():
        o_ref[...] = acc_ref[...].astype(o_ref.dtype)


def _matmul_kernel_fullk(x_ref, w_ref, o_ref):
    """One (tm, tn) output block with the full K dimension resident in one block."""
    o_ref[...] = lax.dot_general(
        x_ref[...], w_ref[...],
        dimension_numbers=(((1,), (1,)), ((), ())),
        preferred_element_type=jnp.float32).astype(o_ref.dtype)


def dylinear_forward(x, weight, *, tile_m=None, tile_n=None, tile_k=None):
    """Pallas implementation of DyLinear.forward: y = x @ weight.T (no bias)."""
    batch, in_fea = x.shape
    out_fea, in_fea_w = weight.shape
    assert in_fea == in_fea_w, "feature dim mismatch"

    out_dtype = x.dtype
    x_bytes = jnp.dtype(x.dtype).itemsize
    w_bytes = jnp.dtype(weight.dtype).itemsize
    o_bytes = jnp.dtype(out_dtype).itemsize

    # Sublane granule for second-minor block dims (8 for f32, 16 for bf16).
    sublane = 16 if x_bytes == 2 else 8

    # Per-generation VMEM budget (64 MiB per TC on v7x, 128 MiB v5e/v6e).
    try:
        vmem_cap = int(pltpu.get_tpu_info().vmem_capacity_bytes)
    except Exception:  # pragma: no cover - conservative fallback
        vmem_cap = 64 << 20
    vmem_budget = vmem_cap - (8 << 20)

    # --- Tile selection: large tiles, shrink caps only if VMEM-infeasible. ---
    user_tiles = (tile_m, tile_n, tile_k)
    max_m, max_n, max_k = 1024, 1024, 2048
    while True:
        tm = _round_up(tile_m, sublane) if tile_m else _choose_tile(batch, sublane, max_m)
        tn = _round_up(tile_n, 128) if tile_n else _choose_tile(out_fea, 128, max_n)
        tk = _round_up(tile_k, 128) if tile_k else _choose_tile(in_fea, 128, max_k)
        # Worst-case (double-buffered) footprint for this tile choice.
        need = (2 * tm * tk * x_bytes + 2 * tn * tk * w_bytes
                + 2 * tm * tn * o_bytes + tm * tn * 4)
        if need <= vmem_budget or any(user_tiles) \
                or (max_k <= 512 and max_m <= 128 and max_n <= 128):
            break
        if max_k > 512:
            max_k //= 2
        elif max_m > 128:
            max_m //= 2
        else:
            max_n //= 2

    # v7x has 2 TensorCores: avoid collapsing the grid to a single block for
    # non-tiny problems.  Prefer a clean N split (no weight padding needed).
    flops = 2 * batch * in_fea * out_fea
    if (not any(user_tiles)) and batch <= tm and out_fea <= tn and in_fea <= tk \
            and flops >= (1 << 27):
        if out_fea % 256 == 0:
            tn = out_fea // 2
        elif batch % (2 * sublane) == 0:
            tm = batch // 2

    m_pad = _round_up(batch, tm)
    n_pad = _round_up(out_fea, tn)
    k_pad = _round_up(in_fea, tk)
    gm, gn, gk = m_pad // tm, n_pad // tn, k_pad // tk

    # Pad only when a tiled dim is unaligned; fast path does zero wrapper copies.
    # (K zero-padding contributes nothing to the dot product; M/N pads are sliced.)
    x_p = x
    if (m_pad, k_pad) != (batch, in_fea):
        x_p = jnp.pad(x, ((0, m_pad - batch), (0, k_pad - in_fea)))
    w_p = weight  # kept in native (out_fea, in_fea) layout: no per-call transpose
    if (n_pad, k_pad) != (out_fea, in_fea):
        w_p = jnp.pad(weight, ((0, n_pad - out_fea), (0, k_pad - in_fea)))

    # Resident operands (constant block index across the whole grid).
    x_resident = (gm == 1 and gk == 1)
    w_resident = (gn == 1 and gk == 1)
    x_bufs = 1 if x_resident else 2
    w_bufs = 1 if w_resident else 2

    vmem_needed = (x_bufs * tm * tk * x_bytes + w_bufs * tn * tk * w_bytes
                   + 2 * tm * tn * o_bytes + (tm * tn * 4 if gk > 1 else 0))
    vmem_limit = int(min(max(vmem_needed + (4 << 20), 32 << 20), vmem_budget))

    # Advisory cost: actual streamed HBM traffic (x re-read per N tile,
    # W re-read per M tile), not the logical one-pass sizes.
    cost = pl.CostEstimate(
        flops=2 * m_pad * k_pad * n_pad,
        transcendentals=0,
        bytes_accessed=(gn * m_pad * k_pad * x_bytes
                        + gm * n_pad * k_pad * w_bytes
                        + m_pad * n_pad * o_bytes),
    )

    def _run(use_single_buffer):
        def spec(block_shape, index_map, resident):
            if use_single_buffer and resident:
                try:
                    return pl.BlockSpec(block_shape, index_map,
                                        pipeline_mode=pl.Buffered(1))
                except TypeError:
                    pass  # older jax without pipeline_mode kwarg
            return pl.BlockSpec(block_shape, index_map)

        if gk == 1:
            # Full K resident per block: write output directly, no accumulator RMW.
            grid = (gm, gn)
            in_specs = [spec((tm, tk), lambda i, j: (i, 0), x_resident),
                        spec((tn, tk), lambda i, j: (j, 0), w_resident)]
            out_specs = pl.BlockSpec((tm, tn), lambda i, j: (i, j))
            kernel = _matmul_kernel_fullk
            scratch = []
            dims = ("parallel", "parallel")
        else:
            grid = (gm, gn, gk)
            in_specs = [spec((tm, tk), lambda i, j, k: (i, k), False),
                        spec((tn, tk), lambda i, j, k: (j, k), False)]
            out_specs = pl.BlockSpec((tm, tn), lambda i, j, k: (i, j))
            kernel = _matmul_kernel_acc
            scratch = [pltpu.VMEM((tm, tn), jnp.float32)]
            dims = ("parallel", "parallel", "arbitrary")

        return pl.pallas_call(
            kernel,
            out_shape=jax.ShapeDtypeStruct((m_pad, n_pad), out_dtype),
            grid_spec=pltpu.PrefetchScalarGridSpec(
                num_scalar_prefetch=0,
                grid=grid,
                in_specs=in_specs,
                out_specs=out_specs,
                scratch_shapes=scratch,
            ),
            compiler_params=pltpu.CompilerParams(
                dimension_semantics=dims,
                vmem_limit_bytes=vmem_limit,
            ),
            cost_estimate=cost,
        )(x_p, w_p)

    if x_resident or w_resident:
        try:
            out_padded = _run(True)
        except Exception:
            # pl.Buffered(1) rejected at construction/lowering on this jax
            # version: retry with default double-buffering (always valid).
            out_padded = _run(False)
    else:
        out_padded = _run(False)

    if (m_pad, n_pad) != (batch, out_fea):
        return out_padded[:batch, :out_fea]
    return out_padded


if __name__ == "__main__":
    # --- Test 1: module-scale demo (DyLinear(in_fea=32, out_fea=16), batch 8).
    # Exercises the aligned fast path: full-dim blocks, zero padding, full-K
    # kernel, single-buffered resident operands.
    in_fea, out_fea, batch = 32, 16, 8
    kx, kw = jax.random.split(jax.random.PRNGKey(0))
    weight = jax.random.normal(kw, (out_fea, in_fea), dtype=jnp.float32)
    x = jax.random.normal(kx, (batch, in_fea), dtype=jnp.float32)

    y = jax.block_until_ready(dylinear_forward(x, weight))
    y_ref = x @ weight.T
    assert y.shape == (batch, out_fea)
    assert jnp.allclose(y, y_ref, atol=1e-5, rtol=1e-5)

    # --- Test 2: bf16 with explicit small tiles -> exercises M/N/K tiling,
    # zero-padding of x and W, the f32 accumulator path and output slicing.
    batch2, in2, out2 = 96, 300, 260
    kx2, kw2 = jax.random.split(jax.random.PRNGKey(1))
    x2 = jax.random.normal(kx2, (batch2, in2), dtype=jnp.float32).astype(jnp.bfloat16)
    w2 = jax.random.normal(kw2, (out2, in2), dtype=jnp.float32).astype(jnp.bfloat16)

    y2 = jax.block_until_ready(
        dylinear_forward(x2, w2, tile_m=64, tile_n=128, tile_k=128))
    ref2 = jnp.dot(x2.astype(jnp.float32), w2.astype(jnp.float32).T)
    assert y2.shape == (batch2, out2)
    assert jnp.allclose(y2.astype(jnp.float32), ref2, atol=5e-2, rtol=2e-2)

    # --- Test 3: long K with default tile selection -> K split over the
    # trailing "arbitrary" axis with the f32 VMEM accumulator, no padding.
    batch3, in3, out3 = 32, 4096, 64
    kx3, kw3 = jax.random.split(jax.random.PRNGKey(2))
    x3 = jax.random.normal(kx3, (batch3, in3), dtype=jnp.float32)
    w3 = jax.random.normal(kw3, (out3, in3), dtype=jnp.float32)

    y3 = jax.block_until_ready(dylinear_forward(x3, w3))
    ref3 = x3 @ w3.T
    assert y3.shape == (batch3, out3)
    assert jnp.allclose(y3, ref3, atol=1e-3, rtol=1e-4)

    print("KERNEL_OK")
</pallas_src>

<mosaic_0001>
module attributes {stable_mosaic.version = 11 : i64} {
  func.func @_matmul_kernel_fullk(%arg0: i32, %arg1: i32, %arg2: memref<8x32xf32, #tpu.memory_space<vmem>>, %arg3: memref<16x32xf32, #tpu.memory_space<vmem>>, %arg4: memref<8x16xf32, #tpu.memory_space<vmem>>) attributes {dimension_semantics = [#tpu.dimension_semantics<parallel>, #tpu.dimension_semantics<parallel>], iteration_bounds = array<i64: 1, 1>, scalar_prefetch = 0 : i64, scratch_operands = 0 : i64, tpu.core_type = #tpu.core_type<tc>, window_params = [{pipeline_mode = #tpu.pipeline_mode<synchronous>, transform_indices = @transform_0, window_bounds = array<i64: 8, 32>}, {pipeline_mode = #tpu.pipeline_mode<synchronous>, transform_indices = @transform_1, window_bounds = array<i64: 16, 32>}, {transform_indices = @transform_2, window_bounds = array<i64: 8, 16>}]} {
    %c0 = arith.constant 0 : index
    %c0_0 = arith.constant 0 : index
    %0 = vector.load %arg2[%c0, %c0_0] : memref<8x32xf32, #tpu.memory_space<vmem>>, vector<8x32xf32>
    %c0_1 = arith.constant 0 : index
    %c0_2 = arith.constant 0 : index
    %1 = vector.load %arg3[%c0_1, %c0_2] : memref<16x32xf32, #tpu.memory_space<vmem>>, vector<16x32xf32>
    %cst = arith.constant dense<0.000000e+00> : vector<8x16xf32>
    %2 = tpu.matmul %0, %1, %cst {dimension_numbers = #tpu.dot_dimension_numbers<[1], [1], [0], [0], [0, 0, 1, 0], [], []>} : vector<8x32xf32>, vector<16x32xf32>, vector<8x16xf32> -> vector<8x16xf32>
    %c0_3 = arith.constant 0 : index
    %c0_4 = arith.constant 0 : index
    %3 = vector.load %arg4[%c0_3, %c0_4] : memref<8x16xf32, #tpu.memory_space<vmem>>, vector<8x16xf32>
    tpu.vector_store %arg4[%c0_3, %c0_4], %2 {strides = array<i32>} : memref<8x16xf32, #tpu.memory_space<vmem>>, vector<8x16xf32>,
    return
  }
  func.func @transform_0(%arg0: i32, %arg1: i32) -> (i32, i32) {
    %c0_i32 = arith.constant 0 : i32
    %c0_i32_0 = arith.constant 0 : i32
    return %arg0, %c0_i32 : i32, i32
  }
  func.func @transform_1(%arg0: i32, %arg1: i32) -> (i32, i32) {
    %c0_i32 = arith.constant 0 : i32
    %c0_i32_0 = arith.constant 0 : i32
    return %arg1, %c0_i32 : i32, i32
  }
  func.func @transform_2(%arg0: i32, %arg1: i32) -> (i32, i32) {
    %c0_i32 = arith.constant 0 : i32
    return %arg0, %arg1 : i32, i32
  }
}

module attributes {stable_mosaic.version = 11 : i64} {
  func.func @_matmul_kernel_fullk(%arg0: i32, %arg1: i32, %arg2: memref<8x32xf32, #tpu.memory_space<vmem>>, %arg3: memref<16x32xf32, #tpu.memory_space<vmem>>, %arg4: memref<8x16xf32, #tpu.memory_space<vmem>>) attributes {dimension_semantics = [#tpu.dimension_semantics<parallel>, #tpu.dimension_semantics<parallel>], iteration_bounds = array<i64: 1, 1>, scalar_prefetch = 0 : i64, scratch_operands = 0 : i64, tpu.core_type = #tpu.core_type<tc>, window_params = [{transform_indices = @transform_0, window_bounds = array<i64: 8, 32>}, {transform_indices = @transform_1, window_bounds = array<i64: 16, 32>}, {transform_indices = @transform_2, window_bounds = array<i64: 8, 16>}]} {
    %c0 = arith.constant 0 : index
    %c0_0 = arith.constant 0 : index
    %0 = vector.load %arg2[%c0, %c0_0] : memref<8x32xf32, #tpu.memory_space<vmem>>, vector<8x32xf32>
    %c0_1 = arith.constant 0 : index
    %c0_2 = arith.constant 0 : index
    %1 = vector.load %arg3[%c0_1, %c0_2] : memref<16x32xf32, #tpu.memory_space<vmem>>, vector<16x32xf32>
    %cst = arith.constant dense<0.000000e+00> : vector<8x16xf32>
    %2 = tpu.matmul %0, %1, %cst {dimension_numbers = #tpu.dot_dimension_numbers<[1], [1], [0], [0], [0, 0, 1, 0], [], []>} : vector<8x32xf32>, vector<16x32xf32>, vector<8x16xf32> -> vector<8x16xf32>
    %c0_3 = arith.constant 0 : index
    %c0_4 = arith.constant 0 : index
    %3 = vector.load %arg4[%c0_3, %c0_4] : memref<8x16xf32, #tpu.memory_space<vmem>>, vector<8x16xf32>
    tpu.vector_store %arg4[%c0_3, %c0_4], %2 {strides = array<i32>} : memref<8x16xf32, #tpu.memory_space<vmem>>, vector<8x16xf32>,
    return
  }
  func.func @transform_0(%arg0: i32, %arg1: i32) -> (i32, i32) {
    %c0_i32 = arith.constant 0 : i32
    %c0_i32_0 = arith.constant 0 : i32
    return %arg0, %c0_i32 : i32, i32
  }
  func.func @transform_1(%arg0: i32, %arg1: i32) -> (i32, i32) {
    %c0_i32 = arith.constant 0 : i32
    %c0_i32_0 = arith.constant 0 : i32
    return %arg1, %c0_i32 : i32, i32
  }
  func.func @transform_2(%arg0: i32, %arg1: i32) -> (i32, i32) {
    %c0_i32 = arith.constant 0 : i32
    return %arg0, %arg1 : i32, i32
  }
}

</mosaic_0001>

<llo_original>
// kernel: tpu_custom_call.1
$region0: #{tpu_custom_call.1}
  #allocation0 [shape = 'u32[]', space=smem, size = 0x4, offset = 0x4, fixed_abs, tag = 'smem constant byte address 0x4 - core index']
  #allocation1 [shape = 'u32[72,128]{1,0:T(1,128)}', space=vmem, size = 0x9000, scoped, tag = 'internal scratch']
  %s0 = inlined_call_operand.hbm [shape: f32[8,32], index: 0, kind: input, shape index: {}]
  %s1 = inlined_call_operand.hbm [shape: f32[16,32], index: 1, kind: input, shape index: {}]
  %s2 = inlined_call_operand.hbm [shape: f32[8,16], index: 2, kind: output, shape index: {}]
  %s3 = sld [smem:[#allocation0]]
  $region26: #{tpu_custom_call.1} parent=0
    _
  %s5 = ssub.s32 1, %s3
  %s6 = scalar_select 0, %s5, %s3
  $region1: #{tpu_custom_call.1} parent=0
    #allocation2 [shape = 'u8[4096]{0}', space=vmem, size = 0x1000, scoped, tag = 'input window, operand 0, single buffered']
    #allocation3 [shape = 's32[1]{0}', space=sflag, size = 0x4, scoped, tag = 'scoped memory for tpu_custom_call.1']
    #allocation4 [shape = 's32[1]{0}', space=sflag, size = 0x4, scoped, tag = 'scoped memory for tpu_custom_call.1']
    #allocation5 [shape = 'u8[8192]{0}', space=vmem, size = 0x2000, scoped, tag = 'input window, operand 1, single buffered']
    #allocation6 [shape = 's32[1]{0}', space=sflag, size = 0x4, scoped, tag = 'scoped memory for tpu_custom_call.1']
    #allocation7 [shape = 'u8[4096]{0}', space=vmem, size = 0x1000, scoped, tag = 'output window, operand 0, single buffered']
    %7 = vsyncpa [#allocation3], 0
    %8 = vsyncpa [#allocation6], 0
    %9 = vsyncpa [#allocation4], 0
    // Predicated region
    $region2: #{tpu_custom_call.1} parent=1 // pred_check
      _
    $region3: #{tpu_custom_call.1} parent=1 // pred_check_branch
      %11 = sbr.rel (0) target = $region5
    $region4: #{tpu_custom_call.1} parent=1 // pred_region
      %13 = vsyncadd [#allocation3], 0
      %s15 = sshll.u32 %s0, 4
      %s16 = int_to_ptr.hbm [resolvable:$true] %s15
      %s17 = sshll.u32 [#allocation2], 4
      %s18 = int_to_ptr.vmem [resolvable:$true] %s17
      %20 = dma.hbm_to_vmem [thread:$0]  %s16, 128, %s18, [#allocation3]
    $region5: #{tpu_custom_call.1} parent=1 // pred_fallthru
      _
    // Predicated region
    $region6: #{tpu_custom_call.1} parent=1 // pred_check
      _
    $region7: #{tpu_custom_call.1} parent=1 // pred_check_branch
      %22 = sbr.rel (0) target = $region9
    $region8: #{tpu_custom_call.1} parent=1 // pred_region
      %24 = vsyncadd [#allocation6], 0
      %s25 = sshll.u32 %s1, 4
      %s26 = int_to_ptr.hbm [resolvable:$true] %s25
      %s27 = sshll.u32 [#allocation5], 4
      %s28 = int_to_ptr.vmem [resolvable:$true] %s27
      %33 = dma.hbm_to_vmem [thread:$0]  %s26, 256, %s28, [#allocation6], 128, 128, 8
    $region9: #{tpu_custom_call.1} parent=1 // pred_fallthru
      _
    // Predicated region
    $region10: #{tpu_custom_call.1} parent=1 // pred_check
      _
    $region11: #{tpu_custom_call.1} parent=1 // pred_check_branch
      %35 = sbr.rel (0) target = $region13
    $region12: #{tpu_custom_call.1} parent=1 // pred_region
      %37 = dma.done [#allocation3], 128
    $region13: #{tpu_custom_call.1} parent=1 // pred_fallthru
      _
    // Predicated region
    $region14: #{tpu_custom_call.1} parent=1 // pred_check
      _
    $region15: #{tpu_custom_call.1} parent=1 // pred_check_branch
      %39 = sbr.rel (0) target = $region17
    $region16: #{tpu_custom_call.1} parent=1 // pred_region
      %41 = dma.done [#allocation6], 256
    $region17: #{tpu_custom_call.1} parent=1 // pred_fallthru
      _
    %v42 = vld [vmem:[#allocation2] sm:$0xff]
    %v43 = vld [vmem:[#allocation5] sm:$0xff]
    %v44 = vld [vmem:[#allocation5 + $0x8] sm:$0xff]
    %vm45 = vcmask 261120
    %v47 = vsel %vm45, %v42, 0
    %v50 = vsel %vm45, %v43, 0
    %v53 = vsel %vm45, %v44, 0
    %55 = vmatpush.xpose.msra.mxu0 0.0
    %56 = vmatpush.xpose.msra.mxu0 0.0
    %57 = vmatpush.xpose.msra.mxu0 0.0
    %58 = vmatpush.xpose.msra.mxu0 0.0
    %59 = vmatpush.xpose.msra.mxu0 0.0
    %60 = vmatpush.xpose.msra.mxu0 0.0
    %61 = vmatpush.xpose.msra.mxu0 0.0
    %62 = vmatpush.xpose.msra.mxu0 0.0
    %63 = vmatpush.xpose.msra.mxu0 0.0
    %64 = vmatpush.xpose.msra.mxu0 0.0
    %65 = vmatpush.xpose.msra.mxu0 0.0
    %66 = vmatpush.xpose.msra.mxu0 0.0
    %67 = vmatpush.xpose.msra.mxu0 0.0
    %68 = vmatpush.xpose.msra.mxu0 0.0
    %69 = vmatpush.xpose.msra.mxu0 %v53
    %70 = vmatpush.xpose.msra.mxu0 %v50
    %71 = vmatmul.f32.gmra.mxu0 %v47
    %v72 = vpop.f32.mrf.mxu0
    %v73 = vadd.f32 0.0, %v72
    %74 = vdwg.mxu0
    %vm75 = vcmask 130048
    %76 = vst.msk [vmem:[#allocation7] sm:$0xff] %vm75, %v73
    // Predicated region
    $region18: #{tpu_custom_call.1} parent=1 // pred_check
      _
    $region19: #{tpu_custom_call.1} parent=1 // pred_check_branch
      %78 = sbr.rel (0) target = $region21
    $region20: #{tpu_custom_call.1} parent=1 // pred_region
      %80 = vsyncadd [#allocation4], 0
      %s82 = sshll.u32 [#allocation7], 4
      %s83 = int_to_ptr.vmem [resolvable:$true] %s82
      %s84 = sshll.u32 %s2, 4
      %s85 = int_to_ptr.hbm [resolvable:$true] %s84
      %87 = dma.vmem_to_hbm [thread:$0]  %s83, 128, %s85, [#allocation4]
    $region21: #{tpu_custom_call.1} parent=1 // pred_fallthru
      _
    // Predicated region
    $region22: #{tpu_custom_call.1} parent=1 // pred_check
      _
    $region23: #{tpu_custom_call.1} parent=1 // pred_check_branch
      %89 = sbr.rel (0) target = $region25
    $region24: #{tpu_custom_call.1} parent=1 // pred_region
      %91 = dma.done [#allocation4], 128
    $region25: #{tpu_custom_call.1} parent=1 // pred_fallthru
      _
    %92 = vsyncpa [#allocation3], 1
    %93 = vsyncpa [#allocation6], 1
    %94 = vsyncpa [#allocation4], 1

// kernel: tpu_custom_call.1
$region0: #{tpu_custom_call.1}
  #allocation0 [shape = 'u32[]', space=smem, size = 0x4, offset = 0x4, fixed_abs, tag = 'smem constant byte address 0x4 - core index']
  #allocation1 [shape = 'u32[72,128]{1,0:T(1,128)}', space=vmem, size = 0x9000, scoped, tag = 'internal scratch']
  %s0 = inlined_call_operand.hbm [shape: f32[8,32], index: 0, kind: input, shape index: {}]
  %s1 = inlined_call_operand.hbm [shape: f32[16,32], index: 1, kind: input, shape index: {}]
  %s2 = inlined_call_operand.hbm [shape: f32[8,16], index: 2, kind: output, shape index: {}]
  %s3 = sld [smem:[#allocation0]]
  $region26: #{tpu_custom_call.1} parent=0
    _
  %s5 = ssub.s32 1, %s3
  %s6 = scalar_select 0, %s5, %s3
  $region1: #{tpu_custom_call.1} parent=0
    #allocation2 [shape = 'u8[4096]{0}', space=vmem, size = 0x1000, scoped, tag = 'input window, operand 0, single buffered']
    #allocation3 [shape = 's32[1]{0}', space=sflag, size = 0x4, scoped, tag = 'scoped memory for tpu_custom_call.1']
    #allocation4 [shape = 's32[1]{0}', space=sflag, size = 0x4, scoped, tag = 'scoped memory for tpu_custom_call.1']
    #allocation5 [shape = 'u8[8192]{0}', space=vmem, size = 0x2000, scoped, tag = 'input window, operand 1, single buffered']
    #allocation6 [shape = 's32[1]{0}', space=sflag, size = 0x4, scoped, tag = 'scoped memory for tpu_custom_call.1']
    #allocation7 [shape = 'u8[4096]{0}', space=vmem, size = 0x1000, scoped, tag = 'output window, operand 0, single buffered']
    %7 = vsyncpa [#allocation3], 0
    %8 = vsyncpa [#allocation6], 0
    %9 = vsyncpa [#allocation4], 0
    // Predicated region
    $region2: #{tpu_custom_call.1} parent=1 // pred_check
      _
    $region3: #{tpu_custom_call.1} parent=1 // pred_check_branch
      %11 = sbr.rel (0) target = $region5
    $region4: #{tpu_custom_call.1} parent=1 // pred_region
      %13 = vsyncadd [#allocation3], 0
      %s15 = sshll.u32 %s0, 4
      %s16 = int_to_ptr.hbm [resolvable:$true] %s15
      %s17 = sshll.u32 [#allocation2], 4
      %s18 = int_to_ptr.vmem [resolvable:$true] %s17
      %20 = dma.hbm_to_vmem [thread:$0]  %s16, 128, %s18, [#allocation3]
    $region5: #{tpu_custom_call.1} parent=1 // pred_fallthru
      _
    // Predicated region
    $region6: #{tpu_custom_call.1} parent=1 // pred_check
      _
    $region7: #{tpu_custom_call.1} parent=1 // pred_check_branch
      %22 = sbr.rel (0) target = $region9
    $region8: #{tpu_custom_call.1} parent=1 // pred_region
      %24 = vsyncadd [#allocation6], 0
      %s25 = sshll.u32 %s1, 4
      %s26 = int_to_ptr.hbm [resolvable:$true] %s25
      %s27 = sshll.u32 [#allocation5], 4
      %s28 = int_to_ptr.vmem [resolvable:$true] %s27
      %33 = dma.hbm_to_vmem [thread:$0]  %s26, 256, %s28, [#allocation6], 128, 128, 8
    $region9: #{tpu_custom_call.1} parent=1 // pred_fallthru
      _
    // Predicated region
    $region10: #{tpu_custom_call.1} parent=1 // pred_check
      _
    $region11: #{tpu_custom_call.1} parent=1 // pred_check_branch
      %35 = sbr.rel (0) target = $region13
    $region12: #{tpu_custom_call.1} parent=1 // pred_region
      %37 = dma.done [#allocation3], 128
    $region13: #{tpu_custom_call.1} parent=1 // pred_fallthru
      _
    // Predicated region
    $region14: #{tpu_custom_call.1} parent=1 // pred_check
      _
    $region15: #{tpu_custom_call.1} parent=1 // pred_check_branch
      %39 = sbr.rel (0) target = $region17
    $region16: #{tpu_custom_call.1} parent=1 // pred_region
      %41 = dma.done [#allocation6], 256
    $region17: #{tpu_custom_call.1} parent=1 // pred_fallthru
      _
    %v42 = vld [vmem:[#allocation2] sm:$0xff]
    %v43 = vld [vmem:[#allocation5] sm:$0xff]
    %v44 = vld [vmem:[#allocation5 + $0x8] sm:$0xff]
    %vm45 = vcmask 261120
    %v47 = vsel %vm45, %v42, 0
    %v50 = vsel %vm45, %v43, 0
    %v53 = vsel %vm45, %v44, 0
    %55 = vmatpush.xpose.msra.mxu0 0.0
    %56 = vmatpush.xpose.msra.mxu0 0.0
    %57 = vmatpush.xpose.msra.mxu0 0.0
    %58 = vmatpush.xpose.msra.mxu0 0.0
    %59 = vmatpush.xpose.msra.mxu0 0.0
    %60 = vmatpush.xpose.msra.mxu0 0.0
    %61 = vmatpush.xpose.msra.mxu0 0.0
    %62 = vmatpush.xpose.msra.mxu0 0.0
    %63 = vmatpush.xpose.msra.mxu0 0.0
    %64 = vmatpush.xpose.msra.mxu0 0.0
    %65 = vmatpush.xpose.msra.mxu0 0.0
    %66 = vmatpush.xpose.msra.mxu0 0.0
    %67 = vmatpush.xpose.msra.mxu0 0.0
    %68 = vmatpush.xpose.msra.mxu0 0.0
    %69 = vmatpush.xpose.msra.mxu0 %v53
    %70 = vmatpush.xpose.msra.mxu0 %v50
    %71 = vmatmul.f32.gmra.mxu0 %v47
    %v72 = vpop.f32.mrf.mxu0
    %v73 = vadd.f32 0.0, %v72
    %74 = vdwg.mxu0
    %vm75 = vcmask 130048
    %76 = vst.msk [vmem:[#allocation7] sm:$0xff] %vm75, %v73
    // Predicated region
    $region18: #{tpu_custom_call.1} parent=1 // pred_check
      _
    $region19: #{tpu_custom_call.1} parent=1 // pred_check_branch
      %78 = sbr.rel (0) target = $region21
    $region20: #{tpu_custom_call.1} parent=1 // pred_region
      %80 = vsyncadd [#allocation4], 0
      %s82 = sshll.u32 [#allocation7], 4
      %s83 = int_to_ptr.vmem [resolvable:$true] %s82
      %s84 = sshll.u32 %s2, 4
      %s85 = int_to_ptr.hbm [resolvable:$true] %s84
      %87 = dma.vmem_to_hbm [thread:$0]  %s83, 128, %s85, [#allocation4]
    $region21: #{tpu_custom_call.1} parent=1 // pred_fallthru
      _
    // Predicated region
    $region22: #{tpu_custom_call.1} parent=1 // pred_check
      _
    $region23: #{tpu_custom_call.1} parent=1 // pred_check_branch
      %89 = sbr.rel (0) target = $region25
    $region24: #{tpu_custom_call.1} parent=1 // pred_region
      %91 = dma.done [#allocation4], 128
    $region25: #{tpu_custom_call.1} parent=1 // pred_fallthru
      _
    %92 = vsyncpa [#allocation3], 1
    %93 = vsyncpa [#allocation6], 1
    %94 = vsyncpa [#allocation4], 1

</llo_original>
